<compile_context>
chip_gen: v5e
topology: v5e:2x2
jax: 0.10.0
libtpu: 0.0.40
codegen_flags: <defaults>
</compile_context>

<pallas_src>
import math

import jax
import jax.numpy as jnp
import numpy as np
from jax.experimental import pallas as pl
from jax.experimental.pallas import tpu as pltpu

SQRT_2PI = math.sqrt(2.0 * math.pi)
BN_EPS = 1e-5


def _gauss_projection(v):
    """GaussProjection with mean / unbiased std over all elements of v (1, P)."""
    n_elems = v.size                                  # static Python int
    m = jnp.sum(v) * (1.0 / n_elems)
    d = v - m
    d2 = d * d
    var = jnp.sum(d2) * (1.0 / (n_elems - 1))         # unbiased (torch.std default)
    inv_2var = 0.5 / var                              # scalar divide (hoisted)
    inv_norm = jax.lax.rsqrt(2.0 * math.pi * var)     # 1/(sqrt(2*pi)*std), EUP rsqrt
    return jnp.exp(-d2 * inv_2var) * inv_norm


def _inference_gate_kernel(scal_ref, x_ref, xsum_ref, wa_ref, wb_ref, o_ref):
    # scal_ref : (num_class, 4) SMEM  -> [b1, b2, bn_offset, unused] per class
    # x_ref    : (1, C, P)      VMEM  -> all_input[n], channels-first, flat spatial
    # xsum_ref : (C, P)         VMEM  -> sum over all 19 branches (precomputed)
    # wa_ref   : (1, 2, C)      VMEM  -> rows [gate1_w ; bn-scaled predict_w[n]]
    # wb_ref   : (1, 2, C)      VMEM  -> rows [gate2_w ; bn-scaled predict_w[n]]
    # o_ref    : (1, 1, P)      VMEM  -> prediction for class n (lane-dense on P)
    n = pl.program_id(0)

    x = x_ref[0]                                   # (C, P)
    x_other = xsum_ref[...] - x                    # sum of the other 18 branches

    # Two fused 2-column matmuls replace the four 1-column convs.
    px = jnp.dot(wa_ref[0], x, preferred_element_type=jnp.float32)        # (2, P)
    po = jnp.dot(wb_ref[0], x_other, preferred_element_type=jnp.float32)  # (2, P)

    b1 = scal_ref[n, 0]
    b2 = scal_ref[n, 1]
    off = scal_ref[n, 2]                           # beta - running_mean * bn_scale

    g1 = _gauss_projection(px[0:1, :] + b1)        # gauss(gate1(x))         (1, P)
    g2 = _gauss_projection(po[0:1, :] + b2)        # gauss(gate2(x_other))   (1, P)

    # pre = dot(wp*s, x + g1*x_other - g2*x) = px1*(1-g2) + g1*po1   (BN scale folded)
    pre = px[1:2, :] * (1.0 - g2) + g1 * po[1:2, :]                         # (1, P)
    o_ref[0] = pre + off


def inference_gate_forward(x_list, gate_w, gate_b, wp, bn):
    """x_list: list of `num` arrays shaped (N, C, H, W) (PyTorch NCHW).
    gate_w: (C, 2) shared [gate1 | gate2] weights, gate_b: (1, 2) biases,
    wp: (num_class, C, 1) predict weights, bn: (num_class, 4) [gamma, beta, rm, rv].
    Returns (N, num_class, H, W), matching torch.cat(outs, dim=1)."""
    num = len(x_list)
    num_class = wp.shape[0]
    N, C, H, W = x_list[0].shape
    P = N * H * W

    # NCHW -> (C, P) channels-first flattened spatial, stacked over the branches.
    # The branch total is computed on the same stacked tensor (one fused XLA pass).
    x_all = jnp.stack(
        [xm.transpose(1, 0, 2, 3).reshape(C, P) for xm in x_list], axis=0
    ).astype(jnp.float32)                                         # (num, C, P)
    x_sum = jnp.sum(x_all, axis=0)                                # (C, P)

    # Fold eval-mode BatchNorm into the predict weights / a per-class offset:
    #   out = (dot(wp, y) - rm) * g/sqrt(rv+eps) + beta
    #       = dot(wp * s, y) + (beta - rm * s),   s = g/sqrt(rv+eps)
    gamma, beta, rmean, rvar = bn[:, 0], bn[:, 1], bn[:, 2], bn[:, 3]
    s = gamma / jnp.sqrt(rvar + BN_EPS)                           # (num_class,)
    wp_s = wp[:, :, 0] * s[:, None]                               # (num_class, C)
    off = beta - rmean * s                                        # (num_class,)

    w1 = gate_w[:, 0]
    w2 = gate_w[:, 1]
    wa = jnp.stack([jnp.broadcast_to(w1, (num_class, C)), wp_s], axis=1)  # (nc,2,C)
    wb = jnp.stack([jnp.broadcast_to(w2, (num_class, C)), wp_s], axis=1)  # (nc,2,C)

    # Tiny per-class scalar table (SMEM): [b1, b2, bn_offset, 0].
    scal = jnp.stack(
        [
            jnp.broadcast_to(gate_b[0, 0], (num_class,)),
            jnp.broadcast_to(gate_b[0, 1], (num_class,)),
            off,
            jnp.zeros((num_class,), jnp.float32),
        ],
        axis=1,
    ).astype(jnp.float32)                                         # (num_class, 4)

    out = pl.pallas_call(
        _inference_gate_kernel,
        out_shape=jax.ShapeDtypeStruct((num_class, 1, P), jnp.float32),
        grid_spec=pltpu.PrefetchScalarGridSpec(
            num_scalar_prefetch=0,
            grid=(num_class,),
            in_specs=[
                pl.BlockSpec(memory_space=pltpu.MemorySpace.SMEM),   # scal
                pl.BlockSpec((1, C, P), lambda n: (n, 0, 0)),        # x_all[n]
                pl.BlockSpec((C, P), lambda n: (0, 0)),              # x_sum (shared)
                pl.BlockSpec((1, 2, C), lambda n: (n, 0, 0)),        # wa[n]
                pl.BlockSpec((1, 2, C), lambda n: (n, 0, 0)),        # wb[n]
            ],
            out_specs=pl.BlockSpec((1, 1, P), lambda n: (n, 0, 0)),
        ),
        compiler_params=pltpu.CompilerParams(dimension_semantics=("parallel",)),
    )(scal, x_all, x_sum, wa, wb)

    # (num_class, 1, P) -> (N, num_class, H, W)
    return out.reshape(num_class, N, H, W).transpose(1, 0, 2, 3)


# ----------------------------- pure-JAX reference ----------------------------
def _ref_forward(x_list, gate_w, gate_b, wp, bn, num_class):
    w1 = gate_w[:, 0]
    w2 = gate_w[:, 1]
    b1 = gate_b[0, 0]
    b2 = gate_b[0, 1]

    def gauss(v):
        m = jnp.mean(v)
        sd = jnp.std(v, ddof=1)
        return jnp.exp(-(v - m) ** 2 / (2.0 * sd ** 2)) / (SQRT_2PI * sd)

    num = len(x_list)
    outs = []
    for m in range(num_class):
        x = x_list[m]
        x_ = sum(x_list[j] for j in range(num) if j != m)
        rt = jnp.einsum("nchw,c->nhw", x, w1)[:, None] + b1
        rt = gauss(rt) * x_
        at = jnp.einsum("nchw,c->nhw", x_, w2)[:, None] + b2
        at = gauss(at) * x
        y = x + rt - at
        pre = jnp.einsum("nchw,c->nhw", y, wp[m, :, 0])[:, None]
        g, beta, rm, rv = bn[m, 0], bn[m, 1], bn[m, 2], bn[m, 3]
        outs.append((pre - rm) * (g / jnp.sqrt(rv + BN_EPS)) + beta)
    return jnp.concatenate(outs, axis=1)


if __name__ == "__main__":
    N, C, H, W = 2, 64, 8, 8          # channels fixed at 64 by the Conv2d layers
    NUM = 19                          # ConvGFRM(num=19) is hard-coded in __init__
    NUM_CLASS = 3

    key = jax.random.PRNGKey(0)
    keys = jax.random.split(key, NUM + 4)

    x_list = [
        jax.random.normal(keys[i], (N, C, H, W), dtype=jnp.float32) for i in range(NUM)
    ]

    # Shared GFRMCell gate weights (Conv2d(64,1,1) -> (C,) weight + scalar bias).
    gate_w = 0.1 * jax.random.normal(keys[NUM], (C, 2), dtype=jnp.float32)      # [w1|w2]
    gate_b = 0.1 * jax.random.normal(keys[NUM + 1], (1, 2), dtype=jnp.float32)  # [b1|b2]
    # Prediction heads: Conv2d(64,1,1,bias=False) weights.
    wp = 0.1 * jax.random.normal(keys[NUM + 2], (NUM_CLASS, C, 1), dtype=jnp.float32)
    # Eval-mode BatchNorm2d(1) params [gamma, beta, running_mean, running_var]
    # (mildly non-default so the BN folding is actually exercised).
    bn_rand = jax.random.normal(keys[NUM + 3], (NUM_CLASS, 4), dtype=jnp.float32)
    bn = jnp.stack(
        [
            1.0 + 0.1 * bn_rand[:, 0],           # gamma
            0.1 * bn_rand[:, 1],                 # beta
            0.1 * bn_rand[:, 2],                 # running_mean
            1.0 + 0.1 * jnp.abs(bn_rand[:, 3]),  # running_var (> 0)
        ],
        axis=1,
    )

    out = inference_gate_forward(x_list, gate_w, gate_b, wp, bn)
    out = jax.block_until_ready(out)

    ref = _ref_forward(x_list, gate_w, gate_b, wp, bn, NUM_CLASS)
    np.testing.assert_allclose(np.asarray(out), np.asarray(ref), rtol=1e-4, atol=1e-4)
    assert out.shape == (N, NUM_CLASS, H, W)

    print("KERNEL_OK")
</pallas_src>

<mosaic_0001>
module attributes {stable_mosaic.version = 11 : i64} {
  func.func @_inference_gate_kernel(%arg0: i32, %arg1: memref<3x4xf32, #tpu.memory_space<smem>>, %arg2: memref<1x64x128xf32, #tpu.memory_space<vmem>>, %arg3: memref<64x128xf32, #tpu.memory_space<vmem>>, %arg4: memref<1x2x64xf32, #tpu.memory_space<vmem>>, %arg5: memref<1x2x64xf32, #tpu.memory_space<vmem>>, %arg6: memref<1x1x128xf32, #tpu.memory_space<vmem>>) attributes {dimension_semantics = [#tpu.dimension_semantics<parallel>], iteration_bounds = array<i64: 3>, scalar_prefetch = 0 : i64, scratch_operands = 0 : i64, tpu.core_type = #tpu.core_type<tc>, window_params = [{transform_indices = @transform_0, window_bounds = array<i64: 3, 4>}, {transform_indices = @transform_1, window_bounds = array<i64: 1, 64, 128>}, {pipeline_mode = #tpu.pipeline_mode<synchronous>, transform_indices = @transform_2, window_bounds = array<i64: 64, 128>}, {transform_indices = @transform_3, window_bounds = array<i64: 1, 2, 64>}, {transform_indices = @transform_4, window_bounds = array<i64: 1, 2, 64>}, {transform_indices = @transform_5, window_bounds = array<i64: 1, 1, 128>}]} {
    %c0 = arith.constant 0 : index
    %c0_0 = arith.constant 0 : index
    %c0_1 = arith.constant 0 : index
    %0 = vector.load %arg2[%c0, %c0_0, %c0_1] : memref<1x64x128xf32, #tpu.memory_space<vmem>>, vector<1x64x128xf32>
    %1 = vector.shape_cast %0 : vector<1x64x128xf32> to vector<64x128xf32>
    %c0_2 = arith.constant 0 : index
    %c0_3 = arith.constant 0 : index
    %2 = vector.load %arg3[%c0_2, %c0_3] : memref<64x128xf32, #tpu.memory_space<vmem>>, vector<64x128xf32>
    %3 = arith.subf %2, %1 : vector<64x128xf32>
    %c0_4 = arith.constant 0 : index
    %c0_5 = arith.constant 0 : index
    %c0_6 = arith.constant 0 : index
    %4 = vector.load %arg4[%c0_4, %c0_5, %c0_6] : memref<1x2x64xf32, #tpu.memory_space<vmem>>, vector<1x2x64xf32>
    %5 = vector.shape_cast %4 : vector<1x2x64xf32> to vector<2x64xf32>
    %cst = arith.constant dense<0.000000e+00> : vector<2x128xf32>
    %6 = tpu.matmul %5, %1, %cst {dimension_numbers = #tpu.dot_dimension_numbers<[1], [0], [0], [1], [0, 0, 1, 1], [], []>} : vector<2x64xf32>, vector<64x128xf32>, vector<2x128xf32> -> vector<2x128xf32>
    %c0_7 = arith.constant 0 : index
    %c0_8 = arith.constant 0 : index
    %c0_9 = arith.constant 0 : index
    %7 = vector.load %arg5[%c0_7, %c0_8, %c0_9] : memref<1x2x64xf32, #tpu.memory_space<vmem>>, vector<1x2x64xf32>
    %8 = vector.shape_cast %7 : vector<1x2x64xf32> to vector<2x64xf32>
    %cst_10 = arith.constant dense<0.000000e+00> : vector<2x128xf32>
    %9 = tpu.matmul %8, %3, %cst_10 {dimension_numbers = #tpu.dot_dimension_numbers<[1], [0], [0], [1], [0, 0, 1, 1], [], []>} : vector<2x64xf32>, vector<64x128xf32>, vector<2x128xf32> -> vector<2x128xf32>
    %10 = arith.index_cast %arg0 : i32 to index
    %c0_11 = arith.constant 0 : index
    %11 = memref.load %arg1[%10, %c0_11] : memref<3x4xf32, #tpu.memory_space<smem>>
    %12 = arith.index_cast %arg0 : i32 to index
    %c1 = arith.constant 1 : index
    %13 = memref.load %arg1[%12, %c1] : memref<3x4xf32, #tpu.memory_space<smem>>
    %14 = arith.index_cast %arg0 : i32 to index
    %c2 = arith.constant 2 : index
    %15 = memref.load %arg1[%14, %c2] : memref<3x4xf32, #tpu.memory_space<smem>>
    %16 = vector.extract_strided_slice %6 {offsets = [0, 0], sizes = [1, 128], strides = [1, 1]} : vector<2x128xf32> to vector<1x128xf32>
    %17 = vector.broadcast %11 : f32 to vector<1x128xf32>
    %18 = arith.addf %16, %17 : vector<1x128xf32>
    %19 = vector.shape_cast %18 : vector<1x128xf32> to vector<1x1x128xf32>
    %cst_12 = arith.constant dense<0.000000e+00> : vector<1xf32>
    %20 = vector.multi_reduction <add>, %19, %cst_12 [1, 2] : vector<1x1x128xf32> to vector<1xf32>
    %21 = vector.shape_cast %20 : vector<1xf32> to vector<1x1x1xf32>
    %22 = vector.extract %21[0, 0, 0] : f32 from vector<1x1x1xf32>
    %cst_13 = arith.constant 7.812500e-03 : f32
    %23 = arith.mulf %22, %cst_13 : f32
    %24 = vector.broadcast %23 : f32 to vector<1x128xf32>
    %25 = arith.subf %18, %24 : vector<1x128xf32>
    %26 = arith.mulf %25, %25 : vector<1x128xf32>
    %27 = vector.shape_cast %26 : vector<1x128xf32> to vector<1x1x128xf32>
    %cst_14 = arith.constant dense<0.000000e+00> : vector<1xf32>
    %28 = vector.multi_reduction <add>, %27, %cst_14 [1, 2] : vector<1x1x128xf32> to vector<1xf32>
    %29 = vector.shape_cast %28 : vector<1xf32> to vector<1x1x1xf32>
    %30 = vector.extract %29[0, 0, 0] : f32 from vector<1x1x1xf32>
    %cst_15 = arith.constant 0.00787401571 : f32
    %31 = arith.mulf %30, %cst_15 : f32
    %cst_16 = arith.constant 5.000000e-01 : f32
    %32 = arith.divf %cst_16, %31 : f32
    %cst_17 = arith.constant 6.28318548 : f32
    %33 = arith.mulf %cst_17, %31 : f32
    %34 = math.rsqrt %33 : f32
    %cst_18 = arith.constant 0.000000e+00 : f32
    %35 = vector.broadcast %cst_18 : f32 to vector<1x128xf32>
    %36 = arith.subf %35, %26 : vector<1x128xf32>
    %37 = vector.broadcast %32 : f32 to vector<1x128xf32>
    %38 = arith.mulf %36, %37 : vector<1x128xf32>
    %39 = math.exp %38 : vector<1x128xf32>
    %40 = vector.broadcast %34 : f32 to vector<1x128xf32>
    %41 = arith.mulf %39, %40 : vector<1x128xf32>
    %42 = vector.extract_strided_slice %9 {offsets = [0, 0], sizes = [1, 128], strides = [1, 1]} : vector<2x128xf32> to vector<1x128xf32>
    %43 = vector.broadcast %13 : f32 to vector<1x128xf32>
    %44 = arith.addf %42, %43 : vector<1x128xf32>
    %45 = vector.shape_cast %44 : vector<1x128xf32> to vector<1x1x128xf32>
    %cst_19 = arith.constant dense<0.000000e+00> : vector<1xf32>
    %46 = vector.multi_reduction <add>, %45, %cst_19 [1, 2] : vector<1x1x128xf32> to vector<1xf32>
    %47 = vector.shape_cast %46 : vector<1xf32> to vector<1x1x1xf32>
    %48 = vector.extract %47[0, 0, 0] : f32 from vector<1x1x1xf32>
    %cst_20 = arith.constant 7.812500e-03 : f32
    %49 = arith.mulf %48, %cst_20 : f32
    %50 = vector.broadcast %49 : f32 to vector<1x128xf32>
    %51 = arith.subf %44, %50 : vector<1x128xf32>
    %52 = arith.mulf %51, %51 : vector<1x128xf32>
    %53 = vector.shape_cast %52 : vector<1x128xf32> to vector<1x1x128xf32>
    %cst_21 = arith.constant dense<0.000000e+00> : vector<1xf32>
    %54 = vector.multi_reduction <add>, %53, %cst_21 [1, 2] : vector<1x1x128xf32> to vector<1xf32>
    %55 = vector.shape_cast %54 : vector<1xf32> to vector<1x1x1xf32>
    %56 = vector.extract %55[0, 0, 0] : f32 from vector<1x1x1xf32>
    %cst_22 = arith.constant 0.00787401571 : f32
    %57 = arith.mulf %56, %cst_22 : f32
    %cst_23 = arith.constant 5.000000e-01 : f32
    %58 = arith.divf %cst_23, %57 : f32
    %cst_24 = arith.constant 6.28318548 : f32
    %59 = arith.mulf %cst_24, %57 : f32
    %60 = math.rsqrt %59 : f32
    %cst_25 = arith.constant 0.000000e+00 : f32
    %61 = vector.broadcast %cst_25 : f32 to vector<1x128xf32>
    %62 = arith.subf %61, %52 : vector<1x128xf32>
    %63 = vector.broadcast %58 : f32 to vector<1x128xf32>
    %64 = arith.mulf %62, %63 : vector<1x128xf32>
    %65 = math.exp %64 : vector<1x128xf32>
    %66 = vector.broadcast %60 : f32 to vector<1x128xf32>
    %67 = arith.mulf %65, %66 : vector<1x128xf32>
    %68 = vector.extract_strided_slice %6 {offsets = [1, 0], sizes = [1, 128], strides = [1, 1]} : vector<2x128xf32> to vector<1x128xf32>
    %cst_26 = arith.constant 1.000000e+00 : f32
    %69 = vector.broadcast %cst_26 : f32 to vector<1x128xf32>
    %70 = arith.subf %69, %67 : vector<1x128xf32>
    %71 = arith.mulf %68, %70 : vector<1x128xf32>
    %72 = vector.extract_strided_slice %9 {offsets = [1, 0], sizes = [1, 128], strides = [1, 1]} : vector<2x128xf32> to vector<1x128xf32>
    %73 = arith.mulf %41, %72 : vector<1x128xf32>
    %74 = arith.addf %71, %73 : vector<1x128xf32>
    %75 = vector.broadcast %15 : f32 to vector<1x128xf32>
    %76 = arith.addf %74, %75 : vector<1x128xf32>
    %c0_27 = arith.constant 0 : index
    %c0_28 = arith.constant 0 : index
    %c0_29 = arith.constant 0 : index
    %77 = vector.load %arg6[%c0_27, %c0_28, %c0_29] : memref<1x1x128xf32, #tpu.memory_space<vmem>>, vector<1x1x128xf32>
    %78 = vector.shape_cast %77 : vector<1x1x128xf32> to vector<1x128xf32>
    %79 = vector.shape_cast %76 : vector<1x128xf32> to vector<1x1x128xf32>
    tpu.vector_store %arg6[%c0_27, %c0_28, %c0_29], %79 {strides = array<i32>} : memref<1x1x128xf32, #tpu.memory_space<vmem>>, vector<1x1x128xf32>,
    return
  }
  func.func @transform_0(%arg0: i32) -> (i32, i32) {
    %c0_i32 = arith.constant 0 : i32
    %c0_i32_0 = arith.constant 0 : i32
    %c0_i32_1 = arith.constant 0 : i32
    return %c0_i32, %c0_i32_0 : i32, i32
  }
  func.func @transform_1(%arg0: i32) -> (i32, i32, i32) {
    %c0_i32 = arith.constant 0 : i32
    %c0_i32_0 = arith.constant 0 : i32
    %c0_i32_1 = arith.constant 0 : i32
    return %arg0, %c0_i32, %c0_i32_0 : i32, i32, i32
  }
  func.func @transform_2(%arg0: i32) -> (i32, i32) {
    %c0_i32 = arith.constant 0 : i32
    %c0_i32_0 = arith.constant 0 : i32
    %c0_i32_1 = arith.constant 0 : i32
    return %c0_i32, %c0_i32_0 : i32, i32
  }
  func.func @transform_3(%arg0: i32) -> (i32, i32, i32) {
    %c0_i32 = arith.constant 0 : i32
    %c0_i32_0 = arith.constant 0 : i32
    %c0_i32_1 = arith.constant 0 : i32
    return %arg0, %c0_i32, %c0_i32_0 : i32, i32, i32
  }
  func.func @transform_4(%arg0: i32) -> (i32, i32, i32) {
    %c0_i32 = arith.constant 0 : i32
    %c0_i32_0 = arith.constant 0 : i32
    %c0_i32_1 = arith.constant 0 : i32
    return %arg0, %c0_i32, %c0_i32_0 : i32, i32, i32
  }
  func.func @transform_5(%arg0: i32) -> (i32, i32, i32) {
    %c0_i32 = arith.constant 0 : i32
    %c0_i32_0 = arith.constant 0 : i32
    %c0_i32_1 = arith.constant 0 : i32
    return %arg0, %c0_i32, %c0_i32_0 : i32, i32, i32
  }
}

</mosaic_0001>

<llo_original>
// kernel: tpu_custom_call.1
$region0: #{tpu_custom_call.1}
  #allocation0 [shape = 'u32[]', space=smem, size = 0x4, offset = 0x4, fixed_abs, tag = 'smem constant byte address 0x4 - core index']
  #allocation1 [shape = 'u32[72,128]{1,0:T(1,128)}', space=vmem, size = 0x9000, scoped, tag = 'internal scratch']
  %s0 = inlined_call_operand.hbm [shape: f32[3,4], index: 0, kind: input, shape index: {}]
  %s1 = inlined_call_operand.hbm [shape: f32[19,64,128], index: 1, kind: input, shape index: {}]
  %s2 = inlined_call_operand.hbm [shape: f32[64,128], index: 2, kind: input, shape index: {}]
  %s3 = inlined_call_operand.hbm [shape: f32[3,2,64], index: 3, kind: input, shape index: {}]
  %s4 = inlined_call_operand.hbm [shape: f32[3,2,64], index: 4, kind: input, shape index: {}]
  %s5 = inlined_call_operand.hbm [shape: f32[3,1,128], index: 5, kind: output, shape index: {}]
  %s6 = sld [smem:[#allocation0]]
  $region73: #{tpu_custom_call.1} parent=0
    _
  %s8 = ssub.s32 1, %s6
  %s9 = scalar_select 0, %s8, %s6
  $region1: #{tpu_custom_call.1} parent=0
    #allocation2 [shape = 'u8[2048]{0}', space=smem, size = 0x800, scoped, tag = 'input window, operand 0, single buffered']
    #allocation3 [shape = 's32[2]{0}', space=sflag, size = 0x8, scoped, tag = 'scoped memory for tpu_custom_call.1']
    #allocation4 [shape = 's32[2]{0}', space=sflag, size = 0x8, scoped, tag = 'scoped memory for tpu_custom_call.1']
    #allocation5 [shape = 's32[2]{0}', space=sflag, size = 0x8, scoped, tag = 'scoped memory for tpu_custom_call.1']
    #allocation6 [shape = 'u8[65536]{0}', space=vmem, size = 0x10000, scoped, tag = 'input window, operand 1']
    #allocation7 [shape = 'u8[32768]{0}', space=vmem, size = 0x8000, scoped, tag = 'input window, operand 2, single buffered']
    #allocation8 [shape = 's32[1]{0}', space=sflag, size = 0x4, scoped, tag = 'scoped memory for tpu_custom_call.1']
    #allocation9 [shape = 'u8[2048]{0}', space=vmem, size = 0x800, scoped, tag = 'input window, operand 3']
    #allocation10 [shape = 'u8[2048]{0}', space=vmem, size = 0x800, scoped, tag = 'input window, operand 4']
    #allocation11 [shape = 'u8[1024]{0}', space=vmem, size = 0x400, scoped, tag = 'output window, operand 0']
    %10 = vsyncpa [#allocation5], 0
    %11 = vsyncpa [#allocation3], 0
    %s12 = scalar_lea.sflag [#allocation3], 1
    %13 = vsyncpa %s12, 0
    %14 = vsyncpa [#allocation8], 0
    %15 = vsyncpa [#allocation4], 0
    %s16 = scalar_lea.sflag [#allocation4], 1
    %17 = vsyncpa %s16, 0
    loop: start=0, step=1, limit=5
    $region2: #{tpu_custom_call.1} parent=1 // loop_pre_header
      _
    $region3: #{tpu_custom_call.1} parent=1 // loop_header
      %s19 = sphi 0, %s23
      %p20 = scmp.ge.s32.totalorder %s19, 5
      %s27 = sphi 0, %s27
      %s29 = sphi 0, %s27
      %s30 = sphi 0, %s29
      %s44 = sphi 0, %s30
      %s50 = sphi 0, %s52
      %s53 = sphi 0, %s50
      %s54 = sphi 0, %s53
      %s70 = sphi 0, %s54
      %s74 = sphi 0, %s74
      %s76 = sphi 0, %s74
      %s77 = sphi 0, %s76
      %s91 = sphi 0, %s77
      %s97 = sphi 0, %s99
      %s100 = sphi 0, %s97
      %s101 = sphi 0, %s100
      %s117 = sphi 0, %s101
      %s123 = sphi 0, %s125
      %s126 = sphi 0, %s123
      %s127 = sphi 0, %s126
      %s143 = sphi 0, %s127
      %s149 = sphi 0, %s151
      %s152 = sphi 0, %s149
      %s153 = sphi 0, %s152
      %s169 = sphi 0, %s153
    $region4: #{tpu_custom_call.1} parent=1 // loop_header_branch
      %22 = sbr.rel (%p20) target = $region8
    $region5: #{tpu_custom_call.1} parent=1 // loop_body
      %s24 = ssub.s32 %s19, 1
      %s25 = ssub.s32 %s19, 2
      %s26 = sadd.s32 %s19, 1
      %s28 = sadd.s32 %s27, 1
      %p31 = scmp.eq.s32.totalorder %s19, 2
      %p32 = scmp.ne.s32.totalorder %s27, %s29
      %p33 = scmp.eq.s32.totalorder %s19, 0
      %p34 = por %p32, %p33
      %p35 = scmp.ne.s32.totalorder %s27, %s29
      %p36 = scmp.eq.s32.totalorder %s24, 2
      %p37 = por %p35, %p36
      %p38 = scmp.ne.s32.totalorder %s29, %s30
      %p39 = scmp.eq.s32.totalorder %s24, 0
      %p40 = por %p38, %p39
      %p41 = scmp.ne.s32.totalorder %s29, %s30
      %p42 = scmp.eq.s32.totalorder %s25, 2
      %p43 = por %p41, %p42
      %p45 = scmp.ne.s32.totalorder %s30, %s44
      %p46 = scmp.eq.s32.totalorder %s25, 0
      %p47 = por %p45, %p46
      %s48 = ssub.s32 %s19, %s26
      %p49 = scmp.eq.s32.totalorder %s48, 0
      %s51 = sadd.s32 %s50, 1
      %s52 = scalar_select %p49, %s50, %s51
      %p55 = pneg %p49
      %p56 = scmp.eq.s32.totalorder %s19, 2
      %p57 = por %p55, %p56
      %p58 = scmp.ne.s32.totalorder %s50, %s53
      %p59 = scmp.eq.s32.totalorder %s19, 0
      %p60 = por %p58, %p59
      %p61 = scmp.ne.s32.totalorder %s50, %s53
      %p62 = scmp.eq.s32.totalorder %s24, 2
      %p63 = por %p61, %p62
      %p64 = scmp.ne.s32.totalorder %s53, %s54
      %p65 = scmp.eq.s32.totalorder %s24, 0
      %p66 = por %p64, %p65
      %p67 = scmp.ne.s32.totalorder %s53, %s54
      %p68 = scmp.eq.s32.totalorder %s25, 2
      %p69 = por %p67, %p68
      %p71 = scmp.ne.s32.totalorder %s54, %s70
      %p72 = scmp.eq.s32.totalorder %s25, 0
      %p73 = por %p71, %p72
      %s75 = sadd.s32 %s74, 1
      %p78 = scmp.eq.s32.totalorder %s19, 2
      %p79 = scmp.ne.s32.totalorder %s74, %s76
      %p80 = scmp.eq.s32.totalorder %s19, 0
      %p81 = por %p79, %p80
      %p82 = scmp.ne.s32.totalorder %s74, %s76
      %p83 = scmp.eq.s32.totalorder %s24, 2
      %p84 = por %p82, %p83
      %p85 = scmp.ne.s32.totalorder %s76, %s77
      %p86 = scmp.eq.s32.totalorder %s24, 0
      %p87 = por %p85, %p86
      %p88 = scmp.ne.s32.totalorder %s76, %s77
      %p89 = scmp.eq.s32.totalorder %s25, 2
      %p90 = por %p88, %p89
      %p92 = scmp.ne.s32.totalorder %s77, %s91
      %p93 = scmp.eq.s32.totalorder %s25, 0
      %p94 = por %p92, %p93
      %s95 = ssub.s32 %s19, %s26
      %p96 = scmp.eq.s32.totalorder %s95, 0
      %s98 = sadd.s32 %s97, 1
      %s99 = scalar_select %p96, %s97, %s98
      %p102 = pneg %p96
      %p103 = scmp.eq.s32.totalorder %s19, 2
      %p104 = por %p102, %p103
      %p105 = scmp.ne.s32.totalorder %s97, %s100
      %p106 = scmp.eq.s32.totalorder %s19, 0
      %p107 = por %p105, %p106
      %p108 = scmp.ne.s32.totalorder %s97, %s100
      %p109 = scmp.eq.s32.totalorder %s24, 2
      %p110 = por %p108, %p109
      %p111 = scmp.ne.s32.totalorder %s100, %s101
      %p112 = scmp.eq.s32.totalorder %s24, 0
      %p113 = por %p111, %p112
      %p114 = scmp.ne.s32.totalorder %s100, %s101
      %p115 = scmp.eq.s32.totalorder %s25, 2
      %p116 = por %p114, %p115
      %p118 = scmp.ne.s32.totalorder %s101, %s117
      %p119 = scmp.eq.s32.totalorder %s25, 0
      %p120 = por %p118, %p119
      %s121 = ssub.s32 %s19, %s26
      %p122 = scmp.eq.s32.totalorder %s121, 0
      %s124 = sadd.s32 %s123, 1
      %s125 = scalar_select %p122, %s123, %s124
      %p128 = pneg %p122
      %p129 = scmp.eq.s32.totalorder %s19, 2
      %p130 = por %p128, %p129
      %p131 = scmp.ne.s32.totalorder %s123, %s126
      %p132 = scmp.eq.s32.totalorder %s19, 0
      %p133 = por %p131, %p132
      %p134 = scmp.ne.s32.totalorder %s123, %s126
      %p135 = scmp.eq.s32.totalorder %s24, 2
      %p136 = por %p134, %p135
      %p137 = scmp.ne.s32.totalorder %s126, %s127
      %p138 = scmp.eq.s32.totalorder %s24, 0
      %p139 = por %p137, %p138
      %p140 = scmp.ne.s32.totalorder %s126, %s127
      %p141 = scmp.eq.s32.totalorder %s25, 2
      %p142 = por %p140, %p141
      %p144 = scmp.ne.s32.totalorder %s127, %s143
      %p145 = scmp.eq.s32.totalorder %s25, 0
      %p146 = por %p144, %p145
      %s147 = ssub.s32 %s19, %s26
      %p148 = scmp.eq.s32.totalorder %s147, 0
      %s150 = sadd.s32 %s149, 1
      %s151 = scalar_select %p148, %s149, %s150
      %p154 = pneg %p148
      %p155 = scmp.eq.s32.totalorder %s19, 2
      %p156 = por %p154, %p155
      %p157 = scmp.ne.s32.totalorder %s149, %s152
      %p158 = scmp.eq.s32.totalorder %s19, 0
      %p159 = por %p157, %p158
      %p160 = scmp.ne.s32.totalorder %s149, %s152
      %p161 = scmp.eq.s32.totalorder %s24, 2
      %p162 = por %p160, %p161
      %p163 = scmp.ne.s32.totalorder %s152, %s153
      %p164 = scmp.eq.s32.totalorder %s24, 0
      %p165 = por %p163, %p164
      %p166 = scmp.ne.s32.totalorder %s152, %s153
      %p167 = scmp.eq.s32.totalorder %s25, 2
      %p168 = por %p166, %p167
      %p170 = scmp.ne.s32.totalorder %s153, %s169
      %p171 = scmp.eq.s32.totalorder %s25, 0
      %p172 = por %p170, %p171
      %p173 = scmp.le.s32.totalorder 1, %s19
      %p174 = scmp.lt.s32.totalorder %s19, 4
      %p175 = pnand %p173, %p174
      %p176 = pneg %p175
      // Predicated region
      $region9: #{tpu_custom_call.1} parent=5 // pred_check
        _
      $region10: #{tpu_custom_call.1} parent=5 // pred_check_branch
        %178 = sbr.rel (%p175) target = $region12
      $region11: #{tpu_custom_call.1} parent=5 // pred_region
        %s179 = ssub.s32 %s19, 1
        // Predicated region
        $region13: #{tpu_custom_call.1} parent=11 // pred_check
          %p180 = pneg %p40
        $region14: #{tpu_custom_call.1} parent=11 // pred_check_branch
          %182 = sbr.rel (%p180) target = $region16
        $region15: #{tpu_custom_call.1} parent=11 // pred_region
          %184 = vsyncadd [#allocation5], 0
          %s186 = sshll.u32 %s0, 4
          %s187 = int_to_ptr.hbm [resolvable:$true] %s186
          %189 = dma.hbm_to_smem %s187, 64, [#allocation2], [#allocation5]
        $region16: #{tpu_custom_call.1} parent=11 // pred_fallthru
          _
        // Predicated region
        $region17: #{tpu_custom_call.1} parent=11 // pred_check
          %p190 = pneg %p87
        $region18: #{tpu_custom_call.1} parent=11 // pred_check_branch
          %192 = sbr.rel (%p190) target = $region20
        $region19: #{tpu_custom_call.1} parent=11 // pred_region
          %194 = vsyncadd [#allocation8], 0
          %s195 = sshll.u32 %s2, 4
          %s196 = int_to_ptr.hbm [resolvable:$true] %s195
          %s197 = sshll.u32 [#allocation7], 4
          %s198 = int_to_ptr.vmem [resolvable:$true] %s197
          %203 = dma.hbm_to_vmem [thread:$0]  %s196, 1024, %s198, [#allocation8], 128, 128, 8
        $region20: #{tpu_custom_call.1} parent=11 // pred_fallthru
          _
      $region12: #{tpu_custom_call.1} parent=5 // pred_fallthru
        _
      %p204 = scmp.lt.s32.totalorder %s19, 3
      // Predicated region
      $region21: #{tpu_custom_call.1} parent=5 // pred_check
        %p205 = pneg %p204
      $region22: #{tpu_custom_call.1} parent=5 // pred_check_branch
        %207 = sbr.rel (%p205) target = $region24
      $region23: #{tpu_custom_call.1} parent=5 // pred_region
        // Predicated region
        $region25: #{tpu_custom_call.1} parent=23 // pred_check
          %p208 = pneg %p60
        $region26: #{tpu_custom_call.1} parent=23 // pred_check_branch
          %210 = sbr.rel (%p208) target = $region28
        $region27: #{tpu_custom_call.1} parent=23 // pred_region
          %s211 = sand.u32 %s19, 1
          %s212 = scalar_lea.sflag [#allocation3], %s211
          %s213 = sand.u32 %s50, 1
          %s214 = smul.addr %s213, 64
          %s215 = scalar_lea.vmem [#allocation6], %s214
          %217 = vsyncadd %s212, 0
          %s218 = smul.addr %s19, 8
          %s219 = smul.addr %s218, 8
          %s220 = scalar_lea.hbm %s1, %s219
          %s221 = sshll.u32 %s220, 4
          %s222 = int_to_ptr.hbm [resolvable:$true] %s221
          %s223 = sshll.u32 %s215, 4
          %s224 = int_to_ptr.vmem [resolvable:$true] %s223
          %229 = dma.hbm_to_vmem [thread:$0]  %s222, 1024, %s224, %s212, 128, 128, 8
        $region28: #{tpu_custom_call.1} parent=23 // pred_fallthru
          _
        // Predicated region
        $region29: #{tpu_custom_call.1} parent=23 // pred_check
          %p230 = pneg %p107
        $region30: #{tpu_custom_call.1} parent=23 // pred_check_branch
          %232 = sbr.rel (%p230) target = $region32
        $region31: #{tpu_custom_call.1} parent=23 // pred_region
          %s233 = sand.u32 %s19, 1
          %s234 = scalar_lea.sflag [#allocation3], %s233
          %s235 = sand.u32 %s97, 1
          %s236 = smul.addr %s235, 2
          %s237 = scalar_lea.vmem [#allocation9], %s236
          %239 = vsyncadd %s234, 0
          %s240 = smul.addr %s19, 2
          %s241 = scalar_lea.hbm %s3, %s240
          %s243 = sshll.u32 %s241, 4
          %s244 = int_to_ptr.hbm [resolvable:$true] %s243
          %s245 = sshll.u32 %s237, 4
          %s246 = int_to_ptr.vmem [resolvable:$true] %s245
          %248 = dma.hbm_to_vmem [thread:$0]  %s244, 32, %s246, %s234
        $region32: #{tpu_custom_call.1} parent=23 // pred_fallthru
          _
        // Predicated region
        $region33: #{tpu_custom_call.1} parent=23 // pred_check
          %p249 = pneg %p133
        $region34: #{tpu_custom_call.1} parent=23 // pred_check_branch
          %251 = sbr.rel (%p249) target = $region36
        $region35: #{tpu_custom_call.1} parent=23 // pred_region
          %s252 = sand.u32 %s19, 1
          %s253 = scalar_lea.sflag [#allocation3], %s252
          %s254 = sand.u32 %s123, 1
          %s255 = smul.addr %s254, 2
          %s256 = scalar_lea.vmem [#allocation10], %s255
          %258 = vsyncadd %s253, 0
          %s259 = smul.addr %s19, 2
          %s260 = scalar_lea.hbm %s4, %s259
          %s262 = sshll.u32 %s260, 4
          %s263 = int_to_ptr.hbm [resolvable:$true] %s262
          %s264 = sshll.u32 %s256, 4
          %s265 = int_to_ptr.vmem [resolvable:$true] %s264
          %267 = dma.hbm_to_vmem [thread:$0]  %s263, 32, %s265, %s253
        $region36: #{tpu_custom_call.1} parent=23 // pred_fallthru
          _
      $region24: #{tpu_custom_call.1} parent=5 // pred_fallthru
        _
      %p268 = scmp.le.s32.totalorder 1, %s19
      %p269 = scmp.lt.s32.totalorder %s19, 4
      %p270 = pnand %p268, %p269
      %p271 = pneg %p270
      // Predicated region
      $region37: #{tpu_custom_call.1} parent=5 // pred_check
        _
      $region38: #{tpu_custom_call.1} parent=5 // pred_check_branch
        %273 = sbr.rel (%p270) target = $region40
      $region39: #{tpu_custom_call.1} parent=5 // pred_region
        %s274 = ssub.s32 %s19, 1
        // Predicated region
        $region41: #{tpu_custom_call.1} parent=39 // pred_check
          %p275 = pneg %p40
        $region42: #{tpu_custom_call.1} parent=39 // pred_check_branch
          %277 = sbr.rel (%p275) target = $region44
        $region43: #{tpu_custom_call.1} parent=39 // pred_region
          %279 = dma.done [#allocation5], 64
        $region44: #{tpu_custom_call.1} parent=39 // pred_fallthru
          _
        %s280 = sand.u32 %s24, 1
        %s281 = scalar_lea.sflag [#allocation3], %s280
        %s282 = sand.u32 %s53, 1
        %s283 = smul.addr %s282, 64
        %s284 = scalar_lea.vmem [#allocation6], %s283
        // Predicated region
        $region45: #{tpu_custom_call.1} parent=39 // pred_check
          %p285 = pneg %p66
        $region46: #{tpu_custom_call.1} parent=39 // pred_check_branch
          %287 = sbr.rel (%p285) target = $region48
        $region47: #{tpu_custom_call.1} parent=39 // pred_region
          %289 = dma.done %s281, 1024
        $region48: #{tpu_custom_call.1} parent=39 // pred_fallthru
          _
        // Predicated region
        $region49: #{tpu_custom_call.1} parent=39 // pred_check
          %p290 = pneg %p87
        $region50: #{tpu_custom_call.1} parent=39 // pred_check_branch
          %292 = sbr.rel (%p290) target = $region52
        $region51: #{tpu_custom_call.1} parent=39 // pred_region
          %294 = dma.done [#allocation8], 1024
        $region52: #{tpu_custom_call.1} parent=39 // pred_fallthru
          _
        %s295 = sand.u32 %s24, 1
        %s296 = scalar_lea.sflag [#allocation3], %s295
        %s297 = sand.u32 %s100, 1
        %s298 = smul.addr %s297, 2
        %s299 = scalar_lea.vmem [#allocation9], %s298
        // Predicated region
        $region53: #{tpu_custom_call.1} parent=39 // pred_check
          %p300 = pneg %p113
        $region54: #{tpu_custom_call.1} parent=39 // pred_check_branch
          %302 = sbr.rel (%p300) target = $region56
        $region55: #{tpu_custom_call.1} parent=39 // pred_region
          %304 = dma.done %s296, 32
        $region56: #{tpu_custom_call.1} parent=39 // pred_fallthru
          _
        %s305 = sand.u32 %s24, 1
        %s306 = scalar_lea.sflag [#allocation3], %s305
        %s307 = sand.u32 %s126, 1
        %s308 = smul.addr %s307, 2
        %s309 = scalar_lea.vmem [#allocation10], %s308
        // Predicated region
        $region57: #{tpu_custom_call.1} parent=39 // pred_check
          %p310 = pneg %p139
        $region58: #{tpu_custom_call.1} parent=39 // pred_check_branch
          %312 = sbr.rel (%p310) target = $region60
        $region59: #{tpu_custom_call.1} parent=39 // pred_region
          %314 = dma.done %s306, 32
        $region60: #{tpu_custom_call.1} parent=39 // pred_fallthru
          _
        %315 = sfence
        %p316 = pneg %p40
        %p317 = pneg %p37
        %s318 = sand.u32 %s24, 1
        %s319 = scalar_lea.sflag [#allocation3], %s318
        %s320 = sand.u32 %s53, 1
        %s321 = smul.addr %s320, 64
        %s322 = scalar_lea.vmem [#allocation6], %s321
        %p323 = pneg %p66
        %p324 = pneg %p63
        %p325 = pneg %p87
        %p326 = pneg %p84
        %s327 = sand.u32 %s24, 1
        %s328 = scalar_lea.sflag [#allocation3], %s327
        %s329 = sand.u32 %s100, 1
        %s330 = smul.addr %s329, 2
        %s331 = scalar_lea.vmem [#allocation9], %s330
        %p332 = pneg %p113
        %p333 = pneg %p110
        %s334 = sand.u32 %s24, 1
        %s335 = scalar_lea.sflag [#allocation3], %s334
        %s336 = sand.u32 %s126, 1
        %s337 = smul.addr %s336, 2
        %s338 = scalar_lea.vmem [#allocation10], %s337
        %p339 = pneg %p139
        %p340 = pneg %p136
        %p341 = pneg %p165
        %p342 = pneg %p162
        %s343 = sand.u32 %s152, 1
        %s344 = scalar_lea.sflag [#allocation4], %s343
        %s345 = sand.u32 %s152, 1
        %s346 = scalar_lea.vmem [#allocation11], %s345
        %v347 = vld [vmem:[%s284] sm:$0xff]
        %v348 = vld [vmem:[%s284 + $0x8] sm:$0xff]
        %v349 = vld [vmem:[%s284 + $0x10] sm:$0xff]
        %v350 = vld [vmem:[%s284 + $0x18] sm:$0xff]
        %v351 = vld [vmem:[%s284 + $0x20] sm:$0xff]
        %v352 = vld [vmem:[%s284 + $0x28] sm:$0xff]
        %v353 = vld [vmem:[%s284 + $0x30] sm:$0xff]
        %v354 = vld [vmem:[%s284 + $0x38] sm:$0xff]
        %v355 = vld [vmem:[#allocation7] sm:$0xff]
        %v356 = vld [vmem:[#allocation7 + $0x8] sm:$0xff]
        %v357 = vld [vmem:[#allocation7 + $0x10] sm:$0xff]
        %v358 = vld [vmem:[#allocation7 + $0x18] sm:$0xff]
        %v359 = vld [vmem:[#allocation7 + $0x20] sm:$0xff]
        %v360 = vld [vmem:[#allocation7 + $0x28] sm:$0xff]
        %v361 = vld [vmem:[#allocation7 + $0x30] sm:$0xff]
        %v362 = vld [vmem:[#allocation7 + $0x38] sm:$0xff]
        %v363 = vsub.f32 %v355, %v347
        %v364 = vsub.f32 %v356, %v348
        %v365 = vsub.f32 %v357, %v349
        %v366 = vsub.f32 %v358, %v350
        %v367 = vsub.f32 %v359, %v351
        %v368 = vsub.f32 %v360, %v352
        %v369 = vsub.f32 %v361, %v353
        %v370 = vsub.f32 %v362, %v354
        %v371 = vld [vmem:[%s299] sm:$0x3]
        %vm372 = vcmask 523264
        %v374 = vsel %vm372, %v371, 0
        %376 = vmatpush.msra.mxu0 0.0
        %377 = vmatpush.msra.mxu0 0.0
        %378 = vmatpush.msra.mxu0 0.0
        %379 = vmatpush.msra.mxu0 0.0
        %380 = vmatpush.msra.mxu0 0.0
        %381 = vmatpush.msra.mxu0 0.0
        %382 = vmatpush.msra.mxu0 0.0
        %383 = vmatpush.msra.mxu0 0.0
        %384 = vmatpush.msra.mxu0 %v354
        %385 = vmatpush.msra.mxu0 %v353
        %386 = vmatpush.msra.mxu0 %v352
        %387 = vmatpush.msra.mxu0 %v351
        %388 = vmatpush.msra.mxu0 %v350
        %389 = vmatpush.msra.mxu0 %v349
        %390 = vmatpush.msra.mxu0 %v348
        %391 = vmatpush.msra.mxu0 %v347
        %392 = vmatmul.f32.gmra.mxu0 %v374
        %v393 = vpop.f32.mrf.mxu0
        %v394 = vadd.f32 0.0, %v393
        %395 = vdwg.mxu0
        %v396 = vld [vmem:[%s309] sm:$0x3]
        %v398 = vsel %vm372, %v396, 0
        %400 = vmatpush.msra.mxu0 0.0
        %401 = vmatpush.msra.mxu0 0.0
        %402 = vmatpush.msra.mxu0 0.0
        %403 = vmatpush.msra.mxu0 0.0
        %404 = vmatpush.msra.mxu0 0.0
        %405 = vmatpush.msra.mxu0 0.0
        %406 = vmatpush.msra.mxu0 0.0
        %407 = vmatpush.msra.mxu0 0.0
        %408 = vmatpush.msra.mxu0 %v370
        %409 = vmatpush.msra.mxu0 %v369
        %410 = vmatpush.msra.mxu0 %v368
        %411 = vmatpush.msra.mxu0 %v367
        %412 = vmatpush.msra.mxu0 %v366
        %413 = vmatpush.msra.mxu0 %v365
        %414 = vmatpush.msra.mxu0 %v364
        %415 = vmatpush.msra.mxu0 %v363
        %416 = vmatmul.f32.gmra.mxu0 %v398
        %v417 = vpop.f32.mrf.mxu0
        %v418 = vadd.f32 0.0, %v417
        %419 = vdwg.mxu0
        %s420 = smul.u32 %s24, 128
        %s421 = sld [smem:[#allocation2 + %s420]]
        %s422 = sadd.s32 %s420, 1
        %s423 = sld [smem:[#allocation2 + %s422]]
        %s424 = sadd.s32 %s420, 2
        %s425 = sld [smem:[#allocation2 + %s424]]
        %v426 = vstv %s421
        %v427 = vadd.f32 %v394, %v426
        %vm428 = vcmask 1040384
        %v429 = vsel %vm428, %v427, 0.0
        %430 = vadd.xlane.f32.xlu0 %v429
        %v431 = vpop.xlane.xlu0 %430
        %v432 = vrot.slane %v431, 4
        %v433 = vadd.f32 %v431, %v432
        %v434 = vrot.slane %v433, 2
        %v435 = vadd.f32 %v433, %v434
        %v436 = vrot.slane %v435, 1
        %v437 = vadd.f32 %v435, %v436
        %s438 = vtos %v437
        %s439 = smul.f32 %s438, 0.0078125
        %v440 = vstv %s439
        %v441 = vsub.f32 %v427, %v440
        %v442 = vmul.f32 %v441, %v441
        %v443 = vsel %vm428, %v442, 0.0
        %444 = vadd.xlane.f32.xlu0 %v443
        %v445 = vpop.xlane.xlu0 %444
        %v446 = vrot.slane %v445, 4
        %v447 = vadd.f32 %v445, %v446
        %v448 = vrot.slane %v447, 2
        %v449 = vadd.f32 %v447, %v448
        %v450 = vrot.slane %v449, 1
        %v451 = vadd.f32 %v449, %v450
        %s452 = vtos %v451
        %s453 = smul.f32 %s452, 0.007874016
        %v454 = vstv %s453
        %v455 = vrcp.pop %v454
        %v456 = vmul.f32 %v454, %v455
        %v457 = vsub.f32 1.0, %v456
        %v458 = vmul.f32 %v455, %v457
        %v459 = vadd.f32 %v455, %v458
        %vm460 = vweird.f32 %v454
        %vm461 = vweird.f32 %v455
        %vm462 = vmor %vm460, %vm461
        %v463 = vsel %vm462, %v455, %v459
        %v464 = vand.u32 2147483647, %v454
        %vm465 = vcmp.eq.f32.partialorder %v464, 8.507059e+37
        %v466 = vand.u32 %v454, 2147483648
        %v467 = vor.u32 1.1754944e-38, %v466
        %v468 = vsel %vm465, %v467, %v463
        %s469 = vtos %v468
        %s470 = smul.f32 0.5, %s469
        %s471 = smul.f32 %s453, 6.2831855
        %v472 = vstv %s471
        %v473 = vrsqrt.pop %v472
        %v474 = vmul.f32 %v473, %v472
        %v475 = vmul.f32 %v474, %v473
        %v476 = vmul.f32 0.5, %v475
        %v477 = vsub.f32 1.5, %v476
        %v478 = vmul.f32 %v473, %v477
        %vm479 = vweird.f32 %v472
        %vm480 = vweird.f32 %v473
        %vm481 = vmor %vm479, %vm480
        %v482 = vsel %vm481, %v473, %v478
        %s483 = vtos %v482
        %v484 = vsub.f32 0.0, %v442
        %v485 = vstv %s470
        %v486 = vmul.f32 %v484, %v485
        %v487 = vmul.f32 %v486, 1.442695
        %v488 = vpow.pop %v487
        %v489 = vstv %s483
        %v490 = vmul.f32 %v488, %v489
        %v491 = vstv %s423
        %v492 = vadd.f32 %v418, %v491
        %v493 = vsel %vm428, %v492, 0.0
        %494 = vadd.xlane.f32.xlu0 %v493
        %v495 = vpop.xlane.xlu0 %494
        %v496 = vrot.slane %v495, 4
        %v497 = vadd.f32 %v495, %v496
        %v498 = vrot.slane %v497, 2
        %v499 = vadd.f32 %v497, %v498
        %v500 = vrot.slane %v499, 1
        %v501 = vadd.f32 %v499, %v500
        %s502 = vtos %v501
        %s503 = smul.f32 %s502, 0.0078125
        %v504 = vstv %s503
        %v505 = vsub.f32 %v492, %v504
        %v506 = vmul.f32 %v505, %v505
        %v507 = vsel %vm428, %v506, 0.0
        %508 = vadd.xlane.f32.xlu0 %v507
        %v509 = vpop.xlane.xlu0 %508
        %v510 = vrot.slane %v509, 4
        %v511 = vadd.f32 %v509, %v510
        %v512 = vrot.slane %v511, 2
        %v513 = vadd.f32 %v511, %v512
        %v514 = vrot.slane %v513, 1
        %v515 = vadd.f32 %v513, %v514
        %s516 = vtos %v515
        %s517 = smul.f32 %s516, 0.007874016
        %v518 = vstv %s517
        %v519 = vrcp.pop %v518
        %v520 = vmul.f32 %v518, %v519
        %v521 = vsub.f32 1.0, %v520
        %v522 = vmul.f32 %v519, %v521
        %v523 = vadd.f32 %v519, %v522
        %vm524 = vweird.f32 %v518
        %vm525 = vweird.f32 %v519
        %vm526 = vmor %vm524, %vm525
        %v527 = vsel %vm526, %v519, %v523
        %v528 = vand.u32 2147483647, %v518
        %vm529 = vcmp.eq.f32.partialorder %v528, 8.507059e+37
        %v530 = vand.u32 %v518, 2147483648
        %v531 = vor.u32 1.1754944e-38, %v530
        %v532 = vsel %vm529, %v531, %v527
        %s533 = vtos %v532
        %s534 = smul.f32 0.5, %s533
        %s535 = smul.f32 %s517, 6.2831855
        %v536 = vstv %s535
        %v537 = vrsqrt.pop %v536
        %v538 = vmul.f32 %v537, %v536
        %v539 = vmul.f32 %v538, %v537
        %v540 = vmul.f32 0.5, %v539
        %v541 = vsub.f32 1.5, %v540
        %v542 = vmul.f32 %v537, %v541
        %vm543 = vweird.f32 %v536
        %vm544 = vweird.f32 %v537
        %vm545 = vmor %vm543, %vm544
        %v546 = vsel %vm545, %v537, %v542
        %s547 = vtos %v546
        %v548 = vsub.f32 0.0, %v506
        %v549 = vstv %s534
        %v550 = vmul.f32 %v548, %v549
        %v551 = vmul.f32 %v550, 1.442695
        %v552 = vpow.pop %v551
        %v553 = vstv %s547
        %v554 = vmul.f32 %v552, %v553
        %v555 = vsub.f32 1.0, %v554
        %v557 = vrot.slane %v555, 7
        %v559 = vmul.f32 %v394, %v557
        %v561 = vrot.slane %v418, 1
        %v563 = vmul.f32 %v490, %v561
        %v565 = vrot.slane %v563, 7
        %v567 = vadd.f32 %v559, %v565
        %v568 = vstv %s425
        %v569 = vadd.f32 %v567, %v568
        %570 = vst [vmem:[%s346 - $0x1] sm:$0x2] %v569
        %s571 = sand.u32 %s152, 1
        %s572 = scalar_lea.sflag [#allocation4], %s571
        %s573 = sand.u32 %s152, 1
        %s574 = scalar_lea.vmem [#allocation11], %s573
        // Predicated region
        $region61: #{tpu_custom_call.1} parent=39 // pred_check
          %p575 = pneg %p162
        $region62: #{tpu_custom_call.1} parent=39 // pred_check_branch
          %577 = sbr.rel (%p575) target = $region64
        $region63: #{tpu_custom_call.1} parent=39 // pred_region
          %579 = vsyncadd %s572, 0
          %s580 = scalar_lea.hbm %s5, %s24
          %s582 = sshll.u32 %s574, 4
          %s583 = int_to_ptr.vmem [resolvable:$true] %s582
          %s584 = sshll.u32 %s580, 4
          %s585 = int_to_ptr.hbm [resolvable:$true] %s584
          %587 = dma.vmem_to_hbm [thread:$0]  %s583, 16, %s585, %s572
        $region64: #{tpu_custom_call.1} parent=39 // pred_fallthru
          _
      $region40: #{tpu_custom_call.1} parent=5 // pred_fallthru
        _
      %p588 = scmp.le.s32.totalorder 2, %s19
      // Predicated region
      $region65: #{tpu_custom_call.1} parent=5 // pred_check
        %p589 = pneg %p588
      $region66: #{tpu_custom_call.1} parent=5 // pred_check_branch
        %591 = sbr.rel (%p589) target = $region68
      $region67: #{tpu_custom_call.1} parent=5 // pred_region
        %s592 = ssub.s32 %s19, 2
        // Predicated region
        $region69: #{tpu_custom_call.1} parent=67 // pred_check
          %p593 = pneg %p168
        $region70: #{tpu_custom_call.1} parent=67 // pred_check_branch
          %595 = sbr.rel (%p593) target = $region72
        $region71: #{tpu_custom_call.1} parent=67 // pred_region
          %s596 = sand.u32 %s153, 1
          %s597 = scalar_lea.sflag [#allocation4], %s596
          %s598 = sand.u32 %s153, 1
          %s599 = scalar_lea.vmem [#allocation11], %s598
          %601 = dma.done %s597, 16
        $region72: #{tpu_custom_call.1} parent=67 // pred_fallthru
          _
      $region68: #{tpu_custom_call.1} parent=5 // pred_fallthru
        _
    $region6: #{tpu_custom_call.1} parent=1 // loop_footer
      %s23 = sadd.s32 1, %s19
    $region7: #{tpu_custom_call.1} parent=1 // loop_footer_branch
      %18 = sbr.rel target = $region3
    $region8: #{tpu_custom_call.1} parent=1 // loop_exit
      _
    %602 = vsyncpa [#allocation3], 1
    %s603 = scalar_lea.sflag [#allocation3], 1
    %604 = vsyncpa %s603, 1
    %605 = vsyncpa [#allocation8], 1
    %606 = vsyncpa [#allocation4], 1
    %s607 = scalar_lea.sflag [#allocation4], 1
    %608 = vsyncpa %s607, 1
    %609 = vsyncpa [#allocation5], 1
    %s610 = scalar_lea.sflag [#allocation5], 1
    %611 = vsyncpa %s610, 1

</llo_original>
